<compile_context>
chip_gen: v7x
topology: tpu7x:2x2x1
jax: 0.10.0
libtpu: 0.0.40
codegen_flags: <defaults>
</compile_context>

<pallas_src>
import jax
import jax.numpy as jnp
from jax.experimental import pallas as pl
from jax.experimental.pallas import tpu as pltpu


# ---------------------------------------------------------------------------
# Fused kernel: three chained MXU matmuls (conv-as-matmul, lin1, lin2) with
# ReLUs, all activations in-register.
#
#   x_ref  : (TB, side*side)      VMEM  (flattened images, lane-dense)
#   wc_ref : (side*side, UU_pad)  VMEM  (conv taps expanded to a dense matrix)
#   cb_ref : (1, UU_pad)          VMEM  (conv bias in valid cols, 0 in padding)
#   w1_ref : (UU_pad, H_pad)      VMEM
#   b1_ref : (1, H_pad)           VMEM
#   w2_ref : (H_pad, D_pad)       VMEM
#   b2_ref : (1, D_pad)           VMEM
#   o_ref  : (TB, D_pad)          VMEM  (lane-dense output)
# ---------------------------------------------------------------------------
def fused_net_kernel(x_ref, wc_ref, cb_ref, w1_ref, b1_ref, w2_ref, b2_ref,
                     o_ref):
    # conv(1->1, valid) + bias + ReLU, expressed as a matmul; the result is
    # already in flattened (TB, U*U padded) layout.
    flat = jnp.dot(x_ref[...], wc_ref[...], preferred_element_type=jnp.float32)
    flat = jnp.maximum(flat + cb_ref[...], 0.0)

    # lin1 + ReLU
    h = jnp.dot(flat, w1_ref[...], preferred_element_type=jnp.float32)
    h = jnp.maximum(h + b1_ref[...], 0.0)

    # lin2
    o = jnp.dot(h, w2_ref[...], preferred_element_type=jnp.float32)
    o_ref[...] = o + b2_ref[...]


# ---------------------------------------------------------------------------
# Wrapper mirroring Net.forward
# ---------------------------------------------------------------------------
def net_forward(x_nchw, params, *, kernel_size):
    """x_nchw: (B, 1, side, side) float32."""
    B, C, side, _ = x_nchw.shape
    assert C == 1
    K = kernel_size
    U = side - K + 1
    S2 = side * side
    UU = U * U
    H = params["w1"].shape[1]
    D_out = params["w2"].shape[1]

    # Batch tile / padding: 128 rows per MXU pass for large batches, else the
    # batch rounded up to a sublane-dense multiple of 8.
    if B >= 128:
        TB = 128
    else:
        TB = ((B + 7) // 8) * 8
    B_pad = ((B + TB - 1) // TB) * TB

    UU_pad = ((UU + 127) // 128) * 128        # lane-dense flattened conv dim
    H_pad = ((H + 127) // 128) * 128          # lane-dense hidden
    D_pad = ((D_out + 127) // 128) * 128      # lane-dense output

    f32 = jnp.float32

    # --- Layout plumbing (wrapper-side, cheap) -----------------------------
    # Flatten images to a lane-dense (B_pad, side*side) slab.
    x = x_nchw[:, 0, :, :].reshape(B, S2).astype(f32)
    x = jnp.pad(x, ((0, B_pad - B), (0, 0)))

    # Expand conv taps into a dense (side*side, UU_pad) matrix: column
    # r*U + c corresponds to output pixel (r, c); row (r+kh)*side + (c+kw)
    # carries tap (kh, kw).
    conv_w = params["conv_w"].reshape(K, K).astype(f32)
    rr, cc, kh, kw = jnp.meshgrid(jnp.arange(U), jnp.arange(U),
                                  jnp.arange(K), jnp.arange(K), indexing="ij")
    out_idx = (rr * U + cc).reshape(-1)
    in_idx = ((rr + kh) * side + (cc + kw)).reshape(-1)
    vals = jnp.broadcast_to(conv_w[None, None, :, :], (U, U, K, K)).reshape(-1)
    w_conv = jnp.zeros((S2, UU_pad), f32).at[in_idx, out_idx].add(vals)

    # Conv bias as a lane vector: bias in valid columns, 0 in the padding so
    # padded columns stay exact zeros after ReLU.
    cb = jnp.zeros((1, UU_pad), f32).at[:, :UU].set(params["conv_b"][0])

    # Zero-pad linear weights/biases to lane-dense widths; padded rows/columns
    # stay zero so the extra lanes carry exact zeros and are sliced off below.
    w1 = jnp.pad(params["w1"].astype(f32), ((0, UU_pad - UU), (0, H_pad - H)))
    b1 = jnp.pad(params["b1"].reshape(1, H).astype(f32),
                 ((0, 0), (0, H_pad - H)))
    w2 = jnp.pad(params["w2"].astype(f32), ((0, H_pad - H), (0, D_pad - D_out)))
    b2 = jnp.pad(params["b2"].reshape(1, D_out).astype(f32),
                 ((0, 0), (0, D_pad - D_out)))

    # --- Cost / VMEM bookkeeping -------------------------------------------
    flops = int(2 * B_pad * (S2 * UU_pad + UU_pad * H_pad + H_pad * D_pad))
    bytes_accessed = int(4 * (x.size + w_conv.size + cb.size + w1.size
                              + b1.size + w2.size + b2.size + B_pad * D_pad))
    block_bytes = 4 * (TB * S2 + S2 * UU_pad + UU_pad + UU_pad * H_pad + H_pad
                       + H_pad * D_pad + D_pad + TB * D_pad)
    vmem_limit = min(2 * block_bytes + (1 << 20), 32 * 1024 * 1024)

    grid = (B_pad // TB,)

    out = pl.pallas_call(
        fused_net_kernel,
        out_shape=jax.ShapeDtypeStruct((B_pad, D_pad), f32),
        grid=grid,
        in_specs=[
            pl.BlockSpec((TB, S2), lambda b: (b, 0)),          # x (batch-tiled)
            pl.BlockSpec((S2, UU_pad), lambda b: (0, 0)),      # conv-as-matmul
            pl.BlockSpec((1, UU_pad), lambda b: (0, 0)),       # conv bias
            pl.BlockSpec((UU_pad, H_pad), lambda b: (0, 0)),   # w1
            pl.BlockSpec((1, H_pad), lambda b: (0, 0)),        # b1
            pl.BlockSpec((H_pad, D_pad), lambda b: (0, 0)),    # w2
            pl.BlockSpec((1, D_pad), lambda b: (0, 0)),        # b2
        ],
        out_specs=pl.BlockSpec((TB, D_pad), lambda b: (b, 0)),
        compiler_params=pltpu.CompilerParams(
            dimension_semantics=("parallel",),
            vmem_limit_bytes=vmem_limit),
        cost_estimate=pl.CostEstimate(flops=flops, transcendentals=0,
                                      bytes_accessed=bytes_accessed),
    )(x, w_conv, cb, w1, b1, w2, b2)

    return out[:B, :D_out]


# ---------------------------------------------------------------------------
# Pure-JAX reference for correctness checking.
# ---------------------------------------------------------------------------
def net_forward_ref(x_nchw, params, *, kernel_size):
    B, _, side, _ = x_nchw.shape
    U = side - kernel_size + 1
    w = params["conv_w"].reshape(1, 1, kernel_size, kernel_size)
    conv = jax.lax.conv_general_dilated(
        x_nchw, w, window_strides=(1, 1), padding="VALID",
        dimension_numbers=("NCHW", "OIHW", "NCHW"),
    ) + params["conv_b"][0]
    xf = jnp.maximum(conv, 0.0).reshape(B, U * U)
    h = jnp.maximum(xf @ params["w1"] + params["b1"], 0.0)
    return h @ params["w2"] + params["b2"]


if __name__ == "__main__":
    # Small shapes consistent with the module: side=16, kernel_size=3 -> U=14,
    # H=32, D_out=10, batch=2.
    B, side, K, H, D_out = 2, 16, 3, 32, 10
    U = side - K + 1

    key = jax.random.PRNGKey(0)
    k0, k1, k2, k3, k4 = jax.random.split(key, 5)

    # Deterministic synthetic params (shapes match the torch module; linear
    # weights stored as (in, out) = torch weight.T).
    params = {
        "conv_w": jax.random.uniform(k1, (K, K), jnp.float32, -1.0 / K, 1.0 / K),
        "conv_b": jax.random.uniform(k2, (1,), jnp.float32, -1.0 / K, 1.0 / K),
        "w1": jax.random.uniform(k3, (U * U, H), jnp.float32,
                                 -1.0 / jnp.sqrt(U * U), 1.0 / jnp.sqrt(U * U)),
        "b1": jnp.full((H,), 0.01, jnp.float32),
        "w2": jax.random.uniform(k4, (H, D_out), jnp.float32,
                                 -1.0 / jnp.sqrt(H), 1.0 / jnp.sqrt(H)),
        "b2": jnp.full((D_out,), -0.01, jnp.float32),
    }

    x = jax.random.normal(k0, (B, 1, side, side), jnp.float32)  # NCHW, C=1

    out = net_forward(x, params, kernel_size=K)
    out = jax.block_until_ready(out)

    ref = jax.block_until_ready(net_forward_ref(x, params, kernel_size=K))
    assert out.shape == (B, D_out)
    assert jnp.allclose(out, ref, rtol=1e-4, atol=1e-4), "mismatch vs reference"

    print("KERNEL_OK")
</pallas_src>

<mosaic_0001>
module attributes {stable_mosaic.version = 11 : i64} {
  func.func @fused_net_kernel(%arg0: i32, %arg1: memref<8x256xf32, #tpu.memory_space<vmem>>, %arg2: memref<256x256xf32, #tpu.memory_space<vmem>>, %arg3: memref<1x256xf32, #tpu.memory_space<vmem>>, %arg4: memref<256x128xf32, #tpu.memory_space<vmem>>, %arg5: memref<1x128xf32, #tpu.memory_space<vmem>>, %arg6: memref<128x128xf32, #tpu.memory_space<vmem>>, %arg7: memref<1x128xf32, #tpu.memory_space<vmem>>, %arg8: memref<8x128xf32, #tpu.memory_space<vmem>>) attributes {dimension_semantics = [#tpu.dimension_semantics<parallel>], iteration_bounds = array<i64: 1>, scalar_prefetch = 0 : i64, scratch_operands = 0 : i64, tpu.core_type = #tpu.core_type<tc>, window_params = [{transform_indices = @transform_0, window_bounds = array<i64: 8, 256>}, {pipeline_mode = #tpu.pipeline_mode<synchronous>, transform_indices = @transform_1, window_bounds = array<i64: 256, 256>}, {pipeline_mode = #tpu.pipeline_mode<synchronous>, transform_indices = @transform_2, window_bounds = array<i64: 1, 256>}, {pipeline_mode = #tpu.pipeline_mode<synchronous>, transform_indices = @transform_3, window_bounds = array<i64: 256, 128>}, {pipeline_mode = #tpu.pipeline_mode<synchronous>, transform_indices = @transform_4, window_bounds = array<i64: 1, 128>}, {pipeline_mode = #tpu.pipeline_mode<synchronous>, transform_indices = @transform_5, window_bounds = array<i64: 128, 128>}, {pipeline_mode = #tpu.pipeline_mode<synchronous>, transform_indices = @transform_6, window_bounds = array<i64: 1, 128>}, {transform_indices = @transform_7, window_bounds = array<i64: 8, 128>}]} {
    %c0 = arith.constant 0 : index
    %c0_0 = arith.constant 0 : index
    %0 = vector.load %arg1[%c0, %c0_0] : memref<8x256xf32, #tpu.memory_space<vmem>>, vector<8x256xf32>
    %c0_1 = arith.constant 0 : index
    %c0_2 = arith.constant 0 : index
    %1 = vector.load %arg2[%c0_1, %c0_2] : memref<256x256xf32, #tpu.memory_space<vmem>>, vector<256x256xf32>
    %cst = arith.constant dense<0.000000e+00> : vector<8x256xf32>
    %2 = tpu.matmul %0, %1, %cst {dimension_numbers = #tpu.dot_dimension_numbers<[1], [0], [0], [1], [0, 0, 1, 1], [], []>} : vector<8x256xf32>, vector<256x256xf32>, vector<8x256xf32> -> vector<8x256xf32>
    %c0_3 = arith.constant 0 : index
    %c0_4 = arith.constant 0 : index
    %3 = vector.load %arg3[%c0_3, %c0_4] : memref<1x256xf32, #tpu.memory_space<vmem>>, vector<1x256xf32>
    %4 = vector.broadcast %3 : vector<1x256xf32> to vector<8x256xf32>
    %5 = arith.addf %2, %4 : vector<8x256xf32>
    %cst_5 = arith.constant 0.000000e+00 : f32
    %6 = vector.broadcast %cst_5 : f32 to vector<8x256xf32>
    %7 = arith.maximumf %5, %6 : vector<8x256xf32>
    %c0_6 = arith.constant 0 : index
    %c0_7 = arith.constant 0 : index
    %8 = vector.load %arg4[%c0_6, %c0_7] : memref<256x128xf32, #tpu.memory_space<vmem>>, vector<256x128xf32>
    %cst_8 = arith.constant dense<0.000000e+00> : vector<8x128xf32>
    %9 = tpu.matmul %7, %8, %cst_8 {dimension_numbers = #tpu.dot_dimension_numbers<[1], [0], [0], [1], [0, 0, 1, 1], [], []>} : vector<8x256xf32>, vector<256x128xf32>, vector<8x128xf32> -> vector<8x128xf32>
    %c0_9 = arith.constant 0 : index
    %c0_10 = arith.constant 0 : index
    %10 = vector.load %arg5[%c0_9, %c0_10] : memref<1x128xf32, #tpu.memory_space<vmem>>, vector<1x128xf32>
    %11 = vector.broadcast %10 : vector<1x128xf32> to vector<8x128xf32>
    %12 = arith.addf %9, %11 : vector<8x128xf32>
    %cst_11 = arith.constant 0.000000e+00 : f32
    %13 = vector.broadcast %cst_11 : f32 to vector<8x128xf32>
    %14 = arith.maximumf %12, %13 : vector<8x128xf32>
    %c0_12 = arith.constant 0 : index
    %c0_13 = arith.constant 0 : index
    %15 = vector.load %arg6[%c0_12, %c0_13] : memref<128x128xf32, #tpu.memory_space<vmem>>, vector<128x128xf32>
    %cst_14 = arith.constant dense<0.000000e+00> : vector<8x128xf32>
    %16 = tpu.matmul %14, %15, %cst_14 {dimension_numbers = #tpu.dot_dimension_numbers<[1], [0], [0], [1], [0, 0, 1, 1], [], []>} : vector<8x128xf32>, vector<128x128xf32>, vector<8x128xf32> -> vector<8x128xf32>
    %c0_15 = arith.constant 0 : index
    %c0_16 = arith.constant 0 : index
    %17 = vector.load %arg7[%c0_15, %c0_16] : memref<1x128xf32, #tpu.memory_space<vmem>>, vector<1x128xf32>
    %18 = vector.broadcast %17 : vector<1x128xf32> to vector<8x128xf32>
    %19 = arith.addf %16, %18 : vector<8x128xf32>
    %c0_17 = arith.constant 0 : index
    %c0_18 = arith.constant 0 : index
    %20 = vector.load %arg8[%c0_17, %c0_18] : memref<8x128xf32, #tpu.memory_space<vmem>>, vector<8x128xf32>
    tpu.vector_store %arg8[%c0_17, %c0_18], %19 {strides = array<i32>} : memref<8x128xf32, #tpu.memory_space<vmem>>, vector<8x128xf32>,
    return
  }
  func.func @transform_0(%arg0: i32) -> (i32, i32) {
    %c0_i32 = arith.constant 0 : i32
    %c0_i32_0 = arith.constant 0 : i32
    return %arg0, %c0_i32 : i32, i32
  }
  func.func @transform_1(%arg0: i32) -> (i32, i32) {
    %c0_i32 = arith.constant 0 : i32
    %c0_i32_0 = arith.constant 0 : i32
    %c0_i32_1 = arith.constant 0 : i32
    return %c0_i32, %c0_i32_0 : i32, i32
  }
  func.func @transform_2(%arg0: i32) -> (i32, i32) {
    %c0_i32 = arith.constant 0 : i32
    %c0_i32_0 = arith.constant 0 : i32
    %c0_i32_1 = arith.constant 0 : i32
    return %c0_i32, %c0_i32_0 : i32, i32
  }
  func.func @transform_3(%arg0: i32) -> (i32, i32) {
    %c0_i32 = arith.constant 0 : i32
    %c0_i32_0 = arith.constant 0 : i32
    %c0_i32_1 = arith.constant 0 : i32
    return %c0_i32, %c0_i32_0 : i32, i32
  }
  func.func @transform_4(%arg0: i32) -> (i32, i32) {
    %c0_i32 = arith.constant 0 : i32
    %c0_i32_0 = arith.constant 0 : i32
    %c0_i32_1 = arith.constant 0 : i32
    return %c0_i32, %c0_i32_0 : i32, i32
  }
  func.func @transform_5(%arg0: i32) -> (i32, i32) {
    %c0_i32 = arith.constant 0 : i32
    %c0_i32_0 = arith.constant 0 : i32
    %c0_i32_1 = arith.constant 0 : i32
    return %c0_i32, %c0_i32_0 : i32, i32
  }
  func.func @transform_6(%arg0: i32) -> (i32, i32) {
    %c0_i32 = arith.constant 0 : i32
    %c0_i32_0 = arith.constant 0 : i32
    %c0_i32_1 = arith.constant 0 : i32
    return %c0_i32, %c0_i32_0 : i32, i32
  }
  func.func @transform_7(%arg0: i32) -> (i32, i32) {
    %c0_i32 = arith.constant 0 : i32
    %c0_i32_0 = arith.constant 0 : i32
    return %arg0, %c0_i32 : i32, i32
  }
}

</mosaic_0001>

<llo_original>
// kernel: tpu_custom_call.1
$region0: #{tpu_custom_call.1}
  #allocation0 [shape = 'u32[]', space=smem, size = 0x4, offset = 0x4, fixed_abs, tag = 'smem constant byte address 0x4 - core index']
  #allocation1 [shape = 'u32[144,128]{1,0:T(1,128)}', space=vmem, size = 0x12000, scoped, tag = 'internal scratch']
  %s0 = inlined_call_operand.hbm [shape: f32[8,256], index: 0, kind: input, shape index: {}]
  %s1 = inlined_call_operand.hbm [shape: f32[256,256], index: 1, kind: input, shape index: {}]
  %s2 = inlined_call_operand.vmem [shape: f32[1,256], index: 2, kind: input, shape index: {}]
  %s3 = inlined_call_operand.hbm [shape: f32[256,128], index: 3, kind: input, shape index: {}]
  %s4 = inlined_call_operand.vmem [shape: f32[1,128], index: 4, kind: input, shape index: {}]
  %s5 = inlined_call_operand.hbm [shape: f32[128,128], index: 5, kind: input, shape index: {}]
  %s6 = inlined_call_operand.vmem [shape: f32[1,128], index: 6, kind: input, shape index: {}]
  %s7 = inlined_call_operand.hbm [shape: f32[8,128], index: 7, kind: output, shape index: {}]
  %s8 = sld [smem:[#allocation0]]
  $region54: #{tpu_custom_call.1} parent=0
    _
  %s10 = ssub.s32 1, %s8
  %s11 = scalar_select 0, %s10, %s8
  $region1: #{tpu_custom_call.1} parent=0
    #allocation2 [shape = 'u8[8192]{0}', space=vmem, size = 0x2000, scoped, tag = 'input window, operand 0, single buffered']
    #allocation3 [shape = 's32[1]{0}', space=sflag, size = 0x4, scoped, tag = 'scoped memory for tpu_custom_call.1']
    #allocation4 [shape = 's32[1]{0}', space=sflag, size = 0x4, scoped, tag = 'scoped memory for tpu_custom_call.1']
    #allocation5 [shape = 'u8[262144]{0}', space=vmem, size = 0x40000, scoped, tag = 'input window, operand 1, single buffered']
    #allocation6 [shape = 's32[1]{0}', space=sflag, size = 0x4, scoped, tag = 'scoped memory for tpu_custom_call.1']
    #allocation7 [shape = 'u8[131072]{0}', space=vmem, size = 0x20000, scoped, tag = 'input window, operand 3, single buffered']
    #allocation8 [shape = 'u8[65536]{0}', space=vmem, size = 0x10000, scoped, tag = 'input window, operand 5, single buffered']
    #allocation9 [shape = 's32[1]{0}', space=sflag, size = 0x4, scoped, tag = 'scoped memory for tpu_custom_call.1']
    #allocation10 [shape = 'u8[4096]{0}', space=vmem, size = 0x1000, scoped, tag = 'output window, operand 0, single buffered']
    %12 = vsyncpa [#allocation3], 0
    %13 = vsyncpa [#allocation6], 0
    %14 = vsyncpa [#allocation9], 0
    %15 = vsyncpa [#allocation4], 0
    // Predicated region
    $region2: #{tpu_custom_call.1} parent=1 // pred_check
      _
    $region3: #{tpu_custom_call.1} parent=1 // pred_check_branch
      %17 = sbr.rel (0) target = $region5
    $region4: #{tpu_custom_call.1} parent=1 // pred_region
      %s19 = ssub.s32 256, 256
      %20 = vsyncadd [#allocation3], %s19
      %s22 = sshll.u32 [#allocation2], 4
      %s23 = int_to_ptr.vmem [resolvable:$true] %s22
      %25 = dma.hbm_to_vmem [thread:$0]  %s0, 256, %s23, [#allocation3]
    $region5: #{tpu_custom_call.1} parent=1 // pred_fallthru
      _
    // Predicated region
    $region6: #{tpu_custom_call.1} parent=1 // pred_check
      _
    $region7: #{tpu_custom_call.1} parent=1 // pred_check_branch
      %27 = sbr.rel (0) target = $region9
    $region8: #{tpu_custom_call.1} parent=1 // pred_region
      %s29 = ssub.s32 8192, 8192
      %30 = vsyncadd [#allocation6], %s29
      %s31 = sshll.u32 [#allocation5], 4
      %s32 = int_to_ptr.vmem [resolvable:$true] %s31
      %37 = dma.hbm_to_vmem [thread:$0]  %s1, 8192, %s32, [#allocation6], 256, 256, 16
    $region9: #{tpu_custom_call.1} parent=1 // pred_fallthru
      _
    // Predicated region
    $region10: #{tpu_custom_call.1} parent=1 // pred_check
      _
    $region11: #{tpu_custom_call.1} parent=1 // pred_check_branch
      %39 = sbr.rel (0) target = $region13
    $region12: #{tpu_custom_call.1} parent=1 // pred_region
      _
    $region13: #{tpu_custom_call.1} parent=1 // pred_fallthru
      _
    // Predicated region
    $region14: #{tpu_custom_call.1} parent=1 // pred_check
      _
    $region15: #{tpu_custom_call.1} parent=1 // pred_check_branch
      %41 = sbr.rel (0) target = $region17
    $region16: #{tpu_custom_call.1} parent=1 // pred_region
      %s43 = ssub.s32 4096, 4096
      %44 = vsyncadd [#allocation6], %s43
      %s45 = sshll.u32 [#allocation7], 4
      %s46 = int_to_ptr.vmem [resolvable:$true] %s45
      %51 = dma.hbm_to_vmem [thread:$0]  %s3, 4096, %s46, [#allocation6], 128, 128, 8
    $region17: #{tpu_custom_call.1} parent=1 // pred_fallthru
      _
    // Predicated region
    $region18: #{tpu_custom_call.1} parent=1 // pred_check
      _
    $region19: #{tpu_custom_call.1} parent=1 // pred_check_branch
      %53 = sbr.rel (0) target = $region21
    $region20: #{tpu_custom_call.1} parent=1 // pred_region
      _
    $region21: #{tpu_custom_call.1} parent=1 // pred_fallthru
      _
    // Predicated region
    $region22: #{tpu_custom_call.1} parent=1 // pred_check
      _
    $region23: #{tpu_custom_call.1} parent=1 // pred_check_branch
      %55 = sbr.rel (0) target = $region25
    $region24: #{tpu_custom_call.1} parent=1 // pred_region
      %s57 = ssub.s32 2048, 2048
      %58 = vsyncadd [#allocation9], %s57
      %s59 = sshll.u32 [#allocation8], 4
      %s60 = int_to_ptr.vmem [resolvable:$true] %s59
      %65 = dma.hbm_to_vmem [thread:$0]  %s5, 2048, %s60, [#allocation9], 128, 128, 8
    $region25: #{tpu_custom_call.1} parent=1 // pred_fallthru
      _
    // Predicated region
    $region26: #{tpu_custom_call.1} parent=1 // pred_check
      _
    $region27: #{tpu_custom_call.1} parent=1 // pred_check_branch
      %67 = sbr.rel (0) target = $region29
    $region28: #{tpu_custom_call.1} parent=1 // pred_region
      _
    $region29: #{tpu_custom_call.1} parent=1 // pred_fallthru
      _
    // Predicated region
    $region30: #{tpu_custom_call.1} parent=1 // pred_check
      _
    $region31: #{tpu_custom_call.1} parent=1 // pred_check_branch
      %69 = sbr.rel (0) target = $region33
    $region32: #{tpu_custom_call.1} parent=1 // pred_region
      %70 = dma.done [#allocation3], 256
    $region33: #{tpu_custom_call.1} parent=1 // pred_fallthru
      _
    // Predicated region
    $region34: #{tpu_custom_call.1} parent=1 // pred_check
      _
    $region35: #{tpu_custom_call.1} parent=1 // pred_check_branch
      %72 = sbr.rel (0) target = $region37
    $region36: #{tpu_custom_call.1} parent=1 // pred_region
      %73 = dma.done [#allocation6], 8192
    $region37: #{tpu_custom_call.1} parent=1 // pred_fallthru
      _
    // Predicated region
    $region38: #{tpu_custom_call.1} parent=1 // pred_check
      _
    $region39: #{tpu_custom_call.1} parent=1 // pred_check_branch
      %75 = sbr.rel (0) target = $region41
    $region40: #{tpu_custom_call.1} parent=1 // pred_region
      %76 = dma.done [#allocation6], 4096
    $region41: #{tpu_custom_call.1} parent=1 // pred_fallthru
      _
    // Predicated region
    $region42: #{tpu_custom_call.1} parent=1 // pred_check
      _
    $region43: #{tpu_custom_call.1} parent=1 // pred_check_branch
      %78 = sbr.rel (0) target = $region45
    $region44: #{tpu_custom_call.1} parent=1 // pred_region
      %79 = dma.done [#allocation9], 2048
    $region45: #{tpu_custom_call.1} parent=1 // pred_fallthru
      _
    %v80 = vld [vmem:[#allocation2] sm:$0xff]
    %v81 = vld [vmem:[#allocation2 + $0x8] sm:$0xff]
    %v82 = vld [vmem:[#allocation5] sm:$0xff]
    %v83 = vld [vmem:[#allocation5 + $0x8] sm:$0xff]
    %v84 = vld [vmem:[#allocation5 + $0x10] sm:$0xff]
    %v85 = vld [vmem:[#allocation5 + $0x18] sm:$0xff]
    %v86 = vld [vmem:[#allocation5 + $0x20] sm:$0xff]
    %v87 = vld [vmem:[#allocation5 + $0x28] sm:$0xff]
    %v88 = vld [vmem:[#allocation5 + $0x30] sm:$0xff]
    %v89 = vld [vmem:[#allocation5 + $0x38] sm:$0xff]
    %v90 = vld [vmem:[#allocation5 + $0x40] sm:$0xff]
    %v91 = vld [vmem:[#allocation5 + $0x48] sm:$0xff]
    %v92 = vld [vmem:[#allocation5 + $0x50] sm:$0xff]
    %v93 = vld [vmem:[#allocation5 + $0x58] sm:$0xff]
    %v94 = vld [vmem:[#allocation5 + $0x60] sm:$0xff]
    %v95 = vld [vmem:[#allocation5 + $0x68] sm:$0xff]
    %v96 = vld [vmem:[#allocation5 + $0x70] sm:$0xff]
    %v97 = vld [vmem:[#allocation5 + $0x78] sm:$0xff]
    %v98 = vld [vmem:[#allocation5 + $0x80] sm:$0xff]
    %v99 = vld [vmem:[#allocation5 + $0x88] sm:$0xff]
    %v100 = vld [vmem:[#allocation5 + $0x90] sm:$0xff]
    %v101 = vld [vmem:[#allocation5 + $0x98] sm:$0xff]
    %v102 = vld [vmem:[#allocation5 + $0xa0] sm:$0xff]
    %v103 = vld [vmem:[#allocation5 + $0xa8] sm:$0xff]
    %v104 = vld [vmem:[#allocation5 + $0xb0] sm:$0xff]
    %v105 = vld [vmem:[#allocation5 + $0xb8] sm:$0xff]
    %v106 = vld [vmem:[#allocation5 + $0xc0] sm:$0xff]
    %v107 = vld [vmem:[#allocation5 + $0xc8] sm:$0xff]
    %v108 = vld [vmem:[#allocation5 + $0xd0] sm:$0xff]
    %v109 = vld [vmem:[#allocation5 + $0xd8] sm:$0xff]
    %v110 = vld [vmem:[#allocation5 + $0xe0] sm:$0xff]
    %v111 = vld [vmem:[#allocation5 + $0xe8] sm:$0xff]
    %v112 = vld [vmem:[#allocation5 + $0xf0] sm:$0xff]
    %v113 = vld [vmem:[#allocation5 + $0xf8] sm:$0xff]
    %v114 = vld [vmem:[#allocation5 + $0x100] sm:$0xff]
    %v115 = vld [vmem:[#allocation5 + $0x108] sm:$0xff]
    %v116 = vld [vmem:[#allocation5 + $0x110] sm:$0xff]
    %v117 = vld [vmem:[#allocation5 + $0x118] sm:$0xff]
    %v118 = vld [vmem:[#allocation5 + $0x120] sm:$0xff]
    %v119 = vld [vmem:[#allocation5 + $0x128] sm:$0xff]
    %v120 = vld [vmem:[#allocation5 + $0x130] sm:$0xff]
    %v121 = vld [vmem:[#allocation5 + $0x138] sm:$0xff]
    %v122 = vld [vmem:[#allocation5 + $0x140] sm:$0xff]
    %v123 = vld [vmem:[#allocation5 + $0x148] sm:$0xff]
    %v124 = vld [vmem:[#allocation5 + $0x150] sm:$0xff]
    %v125 = vld [vmem:[#allocation5 + $0x158] sm:$0xff]
    %v126 = vld [vmem:[#allocation5 + $0x160] sm:$0xff]
    %v127 = vld [vmem:[#allocation5 + $0x168] sm:$0xff]
    %v128 = vld [vmem:[#allocation5 + $0x170] sm:$0xff]
    %v129 = vld [vmem:[#allocation5 + $0x178] sm:$0xff]
    %v130 = vld [vmem:[#allocation5 + $0x180] sm:$0xff]
    %v131 = vld [vmem:[#allocation5 + $0x188] sm:$0xff]
    %v132 = vld [vmem:[#allocation5 + $0x190] sm:$0xff]
    %v133 = vld [vmem:[#allocation5 + $0x198] sm:$0xff]
    %v134 = vld [vmem:[#allocation5 + $0x1a0] sm:$0xff]
    %v135 = vld [vmem:[#allocation5 + $0x1a8] sm:$0xff]
    %v136 = vld [vmem:[#allocation5 + $0x1b0] sm:$0xff]
    %v137 = vld [vmem:[#allocation5 + $0x1b8] sm:$0xff]
    %v138 = vld [vmem:[#allocation5 + $0x1c0] sm:$0xff]
    %v139 = vld [vmem:[#allocation5 + $0x1c8] sm:$0xff]
    %v140 = vld [vmem:[#allocation5 + $0x1d0] sm:$0xff]
    %v141 = vld [vmem:[#allocation5 + $0x1d8] sm:$0xff]
    %v142 = vld [vmem:[#allocation5 + $0x1e0] sm:$0xff]
    %v143 = vld [vmem:[#allocation5 + $0x1e8] sm:$0xff]
    %v144 = vld [vmem:[#allocation5 + $0x1f0] sm:$0xff]
    %v145 = vld [vmem:[#allocation5 + $0x1f8] sm:$0xff]
    %v146 = vld [vmem:[%s2] sm:$0x3]
    %v148 = vlaneseq
    %v149 = vshrl.u32 %v148, 7
    %v150 = vsub.s32 0, %v149
    %v151 = vrot.slane %v146, %v150
    %v152 = vlaneseq
    %v153 = vshrl.u32 %v152, 7
    %v154 = vsub.s32 1, %v153
    %v155 = vrot.slane %v146, %v154
    %158 = vmatprep.subr.mxu0 %v83
    %159 = vmatpush1.msra.mxu0 %v82
    %160 = vmatprep.subr.mxu0 %v85
    %161 = vmatpush1.msra.mxu0 %v84
    %162 = vmatprep.subr.mxu0 %v87
    %163 = vmatpush1.msra.mxu0 %v86
    %164 = vmatprep.subr.mxu0 %v89
    %165 = vmatpush1.msra.mxu0 %v88
    %166 = vmatprep.subr.mxu0 %v91
    %167 = vmatpush1.msra.mxu0 %v90
    %168 = vmatprep.subr.mxu0 %v93
    %169 = vmatpush1.msra.mxu0 %v92
    %170 = vmatprep.subr.mxu0 %v95
    %171 = vmatpush1.msra.mxu0 %v94
    %172 = vmatprep.subr.mxu0 %v97
    %173 = vmatpush1.msra.mxu0 %v96
    %174 = vmatprep.subr.mxu0 %v99
    %175 = vmatpush1.msra.mxu0 %v98
    %176 = vmatprep.subr.mxu0 %v101
    %177 = vmatpush1.msra.mxu0 %v100
    %178 = vmatprep.subr.mxu0 %v103
    %179 = vmatpush1.msra.mxu0 %v102
    %180 = vmatprep.subr.mxu0 %v105
    %181 = vmatpush1.msra.mxu0 %v104
    %182 = vmatprep.subr.mxu0 %v107
    %183 = vmatpush1.msra.mxu0 %v106
    %184 = vmatprep.subr.mxu0 %v109
    %185 = vmatpush1.msra.mxu0 %v108
    %186 = vmatprep.subr.mxu0 %v111
    %187 = vmatpush1.msra.mxu0 %v110
    %188 = vmatprep.subr.mxu0 %v113
    %189 = vmatpush1.msra.mxu0 %v112
    %190 = vmatprep.subr.mxu0 %v115
    %191 = vmatpush1.msra.mxu0 %v114
    %192 = vmatprep.subr.mxu0 %v117
    %193 = vmatpush1.msra.mxu0 %v116
    %194 = vmatprep.subr.mxu0 %v119
    %195 = vmatpush1.msra.mxu0 %v118
    %196 = vmatprep.subr.mxu0 %v121
    %197 = vmatpush1.msra.mxu0 %v120
    %198 = vmatprep.subr.mxu0 %v123
    %199 = vmatpush1.msra.mxu0 %v122
    %200 = vmatprep.subr.mxu0 %v125
    %201 = vmatpush1.msra.mxu0 %v124
    %202 = vmatprep.subr.mxu0 %v127
    %203 = vmatpush1.msra.mxu0 %v126
    %204 = vmatprep.subr.mxu0 %v129
    %205 = vmatpush1.msra.mxu0 %v128
    %206 = vmatprep.subr.mxu0 %v131
    %207 = vmatpush1.msra.mxu0 %v130
    %208 = vmatprep.subr.mxu0 %v133
    %209 = vmatpush1.msra.mxu0 %v132
    %210 = vmatprep.subr.mxu0 %v135
    %211 = vmatpush1.msra.mxu0 %v134
    %212 = vmatprep.subr.mxu0 %v137
    %213 = vmatpush1.msra.mxu0 %v136
    %214 = vmatprep.subr.mxu0 %v139
    %215 = vmatpush1.msra.mxu0 %v138
    %216 = vmatprep.subr.mxu0 %v141
    %217 = vmatpush1.msra.mxu0 %v140
    %218 = vmatprep.subr.mxu0 %v143
    %219 = vmatpush1.msra.mxu0 %v142
    %220 = vmatprep.subr.mxu0 %v145
    %221 = vmatpush1.msra.mxu0 %v144
    %222 = vmatprep.mubr.f32.mxu0 %v81
    %223 = vmatmul.mubr.f32.gmra.mrb[0].mxu0 %v80
    %v224 = vpop.f32.mrb[0].mxu0
    %v225 = vadd.f32 %v151, %v224
    %v226 = vpop.f32.mrb[0].mxu0
    %v227 = vadd.f32 %v155, %v226
    %228 = vdwg.mxu0
    %v229 = vmax.f32 %v225, 0.0
    %v230 = vmax.f32 %v227, 0.0
    %v231 = vld [vmem:[#allocation7] sm:$0xff]
    %v232 = vld [vmem:[#allocation7 + $0x8] sm:$0xff]
    %v233 = vld [vmem:[#allocation7 + $0x10] sm:$0xff]
    %v234 = vld [vmem:[#allocation7 + $0x18] sm:$0xff]
    %v235 = vld [vmem:[#allocation7 + $0x20] sm:$0xff]
    %v236 = vld [vmem:[#allocation7 + $0x28] sm:$0xff]
    %v237 = vld [vmem:[#allocation7 + $0x30] sm:$0xff]
    %v238 = vld [vmem:[#allocation7 + $0x38] sm:$0xff]
    %v239 = vld [vmem:[#allocation7 + $0x40] sm:$0xff]
    %v240 = vld [vmem:[#allocation7 + $0x48] sm:$0xff]
    %v241 = vld [vmem:[#allocation7 + $0x50] sm:$0xff]
    %v242 = vld [vmem:[#allocation7 + $0x58] sm:$0xff]
    %v243 = vld [vmem:[#allocation7 + $0x60] sm:$0xff]
    %v244 = vld [vmem:[#allocation7 + $0x68] sm:$0xff]
    %v245 = vld [vmem:[#allocation7 + $0x70] sm:$0xff]
    %v246 = vld [vmem:[#allocation7 + $0x78] sm:$0xff]
    %v247 = vld [vmem:[#allocation7 + $0x80] sm:$0xff]
    %v248 = vld [vmem:[#allocation7 + $0x88] sm:$0xff]
    %v249 = vld [vmem:[#allocation7 + $0x90] sm:$0xff]
    %v250 = vld [vmem:[#allocation7 + $0x98] sm:$0xff]
    %v251 = vld [vmem:[#allocation7 + $0xa0] sm:$0xff]
    %v252 = vld [vmem:[#allocation7 + $0xa8] sm:$0xff]
    %v253 = vld [vmem:[#allocation7 + $0xb0] sm:$0xff]
    %v254 = vld [vmem:[#allocation7 + $0xb8] sm:$0xff]
    %v255 = vld [vmem:[#allocation7 + $0xc0] sm:$0xff]
    %v256 = vld [vmem:[#allocation7 + $0xc8] sm:$0xff]
    %v257 = vld [vmem:[#allocation7 + $0xd0] sm:$0xff]
    %v258 = vld [vmem:[#allocation7 + $0xd8] sm:$0xff]
    %v259 = vld [vmem:[#allocation7 + $0xe0] sm:$0xff]
    %v260 = vld [vmem:[#allocation7 + $0xe8] sm:$0xff]
    %v261 = vld [vmem:[#allocation7 + $0xf0] sm:$0xff]
    %v262 = vld [vmem:[#allocation7 + $0xf8] sm:$0xff]
    %v263 = vld [vmem:[%s4] sm:$0x1]
    %v265 = vlaneseq
    %v266 = vshrl.u32 %v265, 7
    %v267 = vsub.s32 0, %v266
    %v268 = vrot.slane %v263, %v267
    %270 = vmatprep.subr.mxu0 0.0
    %271 = vmatpush1.msra.mxu0 %v231
    %272 = vmatprep.subr.mxu0 0.0
    %273 = vmatpush1.msra.mxu0 %v232
    %274 = vmatprep.subr.mxu0 0.0
    %275 = vmatpush1.msra.mxu0 %v233
    %276 = vmatprep.subr.mxu0 0.0
    %277 = vmatpush1.msra.mxu0 %v234
    %278 = vmatprep.subr.mxu0 0.0
    %279 = vmatpush1.msra.mxu0 %v235
    %280 = vmatprep.subr.mxu0 0.0
    %281 = vmatpush1.msra.mxu0 %v236
    %282 = vmatprep.subr.mxu0 0.0
    %283 = vmatpush1.msra.mxu0 %v237
    %284 = vmatprep.subr.mxu0 0.0
    %285 = vmatpush1.msra.mxu0 %v238
    %286 = vmatprep.subr.mxu0 0.0
    %287 = vmatpush1.msra.mxu0 %v239
    %288 = vmatprep.subr.mxu0 0.0
    %289 = vmatpush1.msra.mxu0 %v240
    %290 = vmatprep.subr.mxu0 0.0
    %291 = vmatpush1.msra.mxu0 %v241
    %292 = vmatprep.subr.mxu0 0.0
    %293 = vmatpush1.msra.mxu0 %v242
    %294 = vmatprep.subr.mxu0 0.0
    %295 = vmatpush1.msra.mxu0 %v243
    %296 = vmatprep.subr.mxu0 0.0
    %297 = vmatpush1.msra.mxu0 %v244
    %298 = vmatprep.subr.mxu0 0.0
    %299 = vmatpush1.msra.mxu0 %v245
    %300 = vmatprep.subr.mxu0 0.0
    %301 = vmatpush1.msra.mxu0 %v246
    %302 = vmatprep.subr.mxu0 0.0
    %303 = vmatpush1.msra.mxu0 %v247
    %304 = vmatprep.subr.mxu0 0.0
    %305 = vmatpush1.msra.mxu0 %v248
    %306 = vmatprep.subr.mxu0 0.0
    %307 = vmatpush1.msra.mxu0 %v249
    %308 = vmatprep.subr.mxu0 0.0
    %309 = vmatpush1.msra.mxu0 %v250
    %310 = vmatprep.subr.mxu0 0.0
    %311 = vmatpush1.msra.mxu0 %v251
    %312 = vmatprep.subr.mxu0 0.0
    %313 = vmatpush1.msra.mxu0 %v252
    %314 = vmatprep.subr.mxu0 0.0
    %315 = vmatpush1.msra.mxu0 %v253
    %316 = vmatprep.subr.mxu0 0.0
    %317 = vmatpush1.msra.mxu0 %v254
    %318 = vmatprep.subr.mxu0 0.0
    %319 = vmatpush1.msra.mxu0 %v255
    %320 = vmatprep.subr.mxu0 0.0
    %321 = vmatpush1.msra.mxu0 %v256
    %322 = vmatprep.subr.mxu0 0.0
    %323 = vmatpush1.msra.mxu0 %v257
    %324 = vmatprep.subr.mxu0 0.0
    %325 = vmatpush1.msra.mxu0 %v258
    %326 = vmatprep.subr.mxu0 0.0
    %327 = vmatpush1.msra.mxu0 %v259
    %328 = vmatprep.subr.mxu0 0.0
    %329 = vmatpush1.msra.mxu0 %v260
    %330 = vmatprep.subr.mxu0 0.0
    %331 = vmatpush1.msra.mxu0 %v261
    %332 = vmatprep.subr.mxu0 0.0
    %333 = vmatpush1.msra.mxu0 %v262
    %334 = vmatprep.mubr.f32.mxu0 %v230
    %335 = vmatmul.mubr.f32.gmra.mrb[0].mxu0 %v229
    %v336 = vpop.f32.mrb[0].mxu0
    %v337 = vadd.f32 %v268, %v336
    %v338 = vpop.f32.mrb[0].mxu0
    %339 = vdwg.mxu0
    %v340 = vmax.f32 %v337, 0.0
    %v341 = vld [vmem:[#allocation8] sm:$0xff]
    %v342 = vld [vmem:[#allocation8 + $0x8] sm:$0xff]
    %v343 = vld [vmem:[#allocation8 + $0x10] sm:$0xff]
    %v344 = vld [vmem:[#allocation8 + $0x18] sm:$0xff]
    %v345 = vld [vmem:[#allocation8 + $0x20] sm:$0xff]
    %v346 = vld [vmem:[#allocation8 + $0x28] sm:$0xff]
    %v347 = vld [vmem:[#allocation8 + $0x30] sm:$0xff]
    %v348 = vld [vmem:[#allocation8 + $0x38] sm:$0xff]
    %v349 = vld [vmem:[#allocation8 + $0x40] sm:$0xff]
    %v350 = vld [vmem:[#allocation8 + $0x48] sm:$0xff]
    %v351 = vld [vmem:[#allocation8 + $0x50] sm:$0xff]
    %v352 = vld [vmem:[#allocation8 + $0x58] sm:$0xff]
    %v353 = vld [vmem:[#allocation8 + $0x60] sm:$0xff]
    %v354 = vld [vmem:[#allocation8 + $0x68] sm:$0xff]
    %v355 = vld [vmem:[#allocation8 + $0x70] sm:$0xff]
    %v356 = vld [vmem:[#allocation8 + $0x78] sm:$0xff]
    %v357 = vld [vmem:[%s6] sm:$0x1]
    %v359 = vlaneseq
    %v360 = vshrl.u32 %v359, 7
    %v361 = vsub.s32 0, %v360
    %v362 = vrot.slane %v357, %v361
    %364 = vmatprep.subr.mxu0 0.0
    %365 = vmatpush1.msra.mxu0 %v341
    %366 = vmatprep.subr.mxu0 0.0
    %367 = vmatpush1.msra.mxu0 %v342
    %368 = vmatprep.subr.mxu0 0.0
    %369 = vmatpush1.msra.mxu0 %v343
    %370 = vmatprep.subr.mxu0 0.0
    %371 = vmatpush1.msra.mxu0 %v344
    %372 = vmatprep.subr.mxu0 0.0
    %373 = vmatpush1.msra.mxu0 %v345
    %374 = vmatprep.subr.mxu0 0.0
    %375 = vmatpush1.msra.mxu0 %v346
    %376 = vmatprep.subr.mxu0 0.0
    %377 = vmatpush1.msra.mxu0 %v347
    %378 = vmatprep.subr.mxu0 0.0
    %379 = vmatpush1.msra.mxu0 %v348
    %380 = vmatprep.subr.mxu0 0.0
    %381 = vmatpush1.msra.mxu0 %v349
    %382 = vmatprep.subr.mxu0 0.0
    %383 = vmatpush1.msra.mxu0 %v350
    %384 = vmatprep.subr.mxu0 0.0
    %385 = vmatpush1.msra.mxu0 %v351
    %386 = vmatprep.subr.mxu0 0.0
    %387 = vmatpush1.msra.mxu0 %v352
    %388 = vmatprep.subr.mxu0 0.0
    %389 = vmatpush1.msra.mxu0 %v353
    %390 = vmatprep.subr.mxu0 0.0
    %391 = vmatpush1.msra.mxu0 %v354
    %392 = vmatprep.subr.mxu0 0.0
    %393 = vmatpush1.msra.mxu0 %v355
    %394 = vmatprep.subr.mxu0 0.0
    %395 = vmatpush1.msra.mxu0 %v356
    %396 = vmatprep.subr.mxu0 0.0
    %397 = vmatpush1.msra.mxu0 0.0
    %398 = vmatprep.subr.mxu0 0.0
    %399 = vmatpush1.msra.mxu0 0.0
    %400 = vmatprep.subr.mxu0 0.0
    %401 = vmatpush1.msra.mxu0 0.0
    %402 = vmatprep.subr.mxu0 0.0
    %403 = vmatpush1.msra.mxu0 0.0
    %404 = vmatprep.subr.mxu0 0.0
    %405 = vmatpush1.msra.mxu0 0.0
    %406 = vmatprep.subr.mxu0 0.0
    %407 = vmatpush1.msra.mxu0 0.0
    %408 = vmatprep.subr.mxu0 0.0
    %409 = vmatpush1.msra.mxu0 0.0
    %410 = vmatprep.subr.mxu0 0.0
    %411 = vmatpush1.msra.mxu0 0.0
    %412 = vmatprep.subr.mxu0 0.0
    %413 = vmatpush1.msra.mxu0 0.0
    %414 = vmatprep.subr.mxu0 0.0
    %415 = vmatpush1.msra.mxu0 0.0
    %416 = vmatprep.subr.mxu0 0.0
    %417 = vmatpush1.msra.mxu0 0.0
    %418 = vmatprep.subr.mxu0 0.0
    %419 = vmatpush1.msra.mxu0 0.0
    %420 = vmatprep.subr.mxu0 0.0
    %421 = vmatpush1.msra.mxu0 0.0
    %422 = vmatprep.subr.mxu0 0.0
    %423 = vmatpush1.msra.mxu0 0.0
    %424 = vmatprep.subr.mxu0 0.0
    %425 = vmatpush1.msra.mxu0 0.0
    %426 = vmatprep.subr.mxu0 0.0
    %427 = vmatpush1.msra.mxu0 0.0
    %428 = vmatprep.mubr.f32.mxu0 0.0
    %429 = vmatmul.mubr.f32.gmra.mrb[0].mxu0 %v340
    %v430 = vpop.f32.mrb[0].mxu0
    %v431 = vadd.f32 %v362, %v430
    %v432 = vpop.f32.mrb[0].mxu0
    %433 = vdwg.mxu0
    %434 = vst [vmem:[#allocation10] sm:$0xff] %v431
    // Predicated region
    $region46: #{tpu_custom_call.1} parent=1 // pred_check
      _
    $region47: #{tpu_custom_call.1} parent=1 // pred_check_branch
      %436 = sbr.rel (0) target = $region49
    $region48: #{tpu_custom_call.1} parent=1 // pred_region
      %s438 = ssub.s32 128, 128
      %439 = vsyncadd [#allocation4], %s438
      %s441 = sshll.u32 [#allocation10], 4
      %s442 = int_to_ptr.vmem [resolvable:$true] %s441
      %444 = dma.vmem_to_hbm [thread:$0]  %s442, 128, %s7, [#allocation4]
    $region49: #{tpu_custom_call.1} parent=1 // pred_fallthru
      _
    // Predicated region
    $region50: #{tpu_custom_call.1} parent=1 // pred_check
      _
    $region51: #{tpu_custom_call.1} parent=1 // pred_check_branch
      %446 = sbr.rel (0) target = $region53
    $region52: #{tpu_custom_call.1} parent=1 // pred_region
      %447 = dma.done [#allocation4], 128
    $region53: #{tpu_custom_call.1} parent=1 // pred_fallthru
      _
    %448 = vsyncpa [#allocation3], 1
    %449 = vsyncpa [#allocation6], 1
    %450 = vsyncpa [#allocation9], 1
    %451 = vsyncpa [#allocation4], 1

</llo_original>
